<compile_context>
chip_gen: v6e
topology: v6e:2x2x1
jax: 0.10.0
libtpu: 0.0.40
codegen_flags: <defaults>
</compile_context>

<pallas_src>
from functools import partial

import jax
import jax.numpy as jnp
from jax.experimental import pallas as pl
from jax.experimental.pallas import tpu as pltpu

EPS = 1e-3          # nn.BatchNorm2d(eps=0.001)
LANE = 128
MAX_THW = 2048      # upper bound on HW-lanes per grid step


def _vmem_limit_bytes():
    # Generation-aware scoped-VMEM budget: ~3/4 of physical, capped at 64 MiB
    # (v7x has 64 MiB physical -> 48 MiB; v5e/v6e have 128 MiB -> 64 MiB).
    try:
        cap = int(pltpu.get_tpu_info().vmem_capacity_bytes)
    except Exception:
        cap = 64 * 1024 * 1024
    return max(32 * 1024 * 1024, min((cap * 3) // 4, 64 * 1024 * 1024))


VMEM_LIMIT = _vmem_limit_bytes()


# --------------------------------------------------------------------------- kernels
def _conv_kernel(p_ref, w_ref, o_ref):
    # Conv only: y[Cout, THW] = W[Cout, K] @ P[K, THW]   (bf16 in, f32 acc)
    o_ref[0] = jnp.dot(w_ref[...], p_ref[0],
                       preferred_element_type=jnp.float32).astype(o_ref.dtype)


def _conv_stats_kernel(p_ref, w_ref, y_ref, psum_ref, psq_ref):
    # Pass 1 (yraw path): conv tile, cast write-back (bf16), per-tile f32 partial stats.
    y = jnp.dot(w_ref[...], p_ref[0], preferred_element_type=jnp.float32)  # (Cout, THW)
    y_ref[0] = y.astype(y_ref.dtype)
    psum_ref[0, 0] = jnp.sum(y, axis=1, keepdims=True)        # (Cout, 1)
    psq_ref[0, 0] = jnp.sum(y * y, axis=1, keepdims=True)


def _stats_only_kernel(p_ref, w_ref, psum_ref, psq_ref):
    # Pass 1 (recompute path): per-tile partial stats only, no intermediate write-back.
    y = jnp.dot(w_ref[...], p_ref[0], preferred_element_type=jnp.float32)
    psum_ref[0, 0] = jnp.sum(y, axis=1, keepdims=True)
    psq_ref[0, 0] = jnp.sum(y * y, axis=1, keepdims=True)


def _bn_prelu_kernel(y_ref, scale_ref, shift_ref, alpha_ref, o_ref):
    # Pass 2 (yraw path): affine BN + per-channel PReLU.
    y = y_ref[0].astype(jnp.float32) * scale_ref[...] + shift_ref[...]
    o_ref[0] = jnp.where(y >= 0.0, y, alpha_ref[...] * y).astype(o_ref.dtype)


def _conv_bn_prelu_kernel(p_ref, w_ref, scale_ref, shift_ref, alpha_ref, o_ref):
    # Pass 2 (recompute path): conv fused with affine BN + PReLU.
    y = jnp.dot(w_ref[...], p_ref[0], preferred_element_type=jnp.float32)
    y = y * scale_ref[...] + shift_ref[...]
    o_ref[0] = jnp.where(y >= 0.0, y, alpha_ref[...] * y).astype(o_ref.dtype)


# --------------------------------------------------------------------------- helpers
def _as_pair(v):
    return (v, v) if isinstance(v, int) else tuple(v)


def _im2col_t(x, kh, kw, stride, padding, dilation, compute_dtype):
    """x: [N, Cin, H, W] -> lane-dense transposed patches [N, K, Hout*Wout],
    K = kh*kw*Cin ordered (i, j, ci)."""
    N, C, H, W = x.shape
    sh, sw = stride
    ph, pw = padding
    dh, dw = dilation
    Hout = (H + 2 * ph - dh * (kh - 1) - 1) // sh + 1
    Wout = (W + 2 * pw - dw * (kw - 1) - 1) // sw + 1
    xp = jnp.pad(x.astype(compute_dtype), ((0, 0), (0, 0), (ph, ph), (pw, pw)))
    taps = []
    for i in range(kh):
        for j in range(kw):
            taps.append(xp[:, :,
                           i * dh: i * dh + (Hout - 1) * sh + 1: sh,
                           j * dw: j * dw + (Wout - 1) * sw + 1: sw])   # [N, C, Hout, Wout]
    p = jnp.stack(taps, axis=1)                        # [N, kh*kw, C, Hout, Wout]
    p = p.reshape(N, kh * kw * C, Hout * Wout)         # [N, K, HW]
    return p, Hout, Wout


def _pick_thw(K, Cout, hw_aligned):
    """Largest lane tile (multiple of 128, <= MAX_THW) fitting the VMEM budget,
    preferring a divisor of hw_aligned so no HW padding/copy is needed."""
    budget = VMEM_LIMIT // 2
    weight_bytes = 2 * Cout * K * 2                        # double-buffered bf16 weight
    per_lane = 2 * (K * 2) + 2 * (Cout * 4) + 2 * (Cout * 2)
    t = (budget - weight_bytes) // max(per_lane, 1)
    t = max(LANE, min(MAX_THW, (t // LANE) * LANE))
    t = min(t, hw_aligned)
    for cand in range(t, LANE - 1, -LANE):
        if hw_aligned % cand == 0:
            return cand
    return t


# --------------------------------------------------------------------------- wrapper
def conv_forward(x, weight, gamma=None, beta=None, alpha=None, *,
                 stride=1, padding=0, dilation=(1, 1), groups=1, bn_acti=False,
                 compute_dtype=jnp.bfloat16):
    """Forward of CFPnet Conv (bias=False). x: [N, Cin, H, W] NCHW -> [N, Cout, Hout, Wout]."""
    # TODO(synk): grouped / depthwise conv (groups > 1) path not implemented.
    assert groups == 1
    stride, padding, dilation = map(_as_pair, (stride, padding, dilation))
    N, Cin, H, W = x.shape
    Cout, _, kh, kw = weight.shape
    sh, sw = stride

    if kh == 1 and kw == 1 and padding == (0, 0):
        # 1x1 conv: no im2col — x itself is the lane-dense patch matrix.
        xs = x if (sh, sw) == (1, 1) else x[:, :, ::sh, ::sw]
        Hout, Wout = xs.shape[2], xs.shape[3]
        patches = xs.reshape(N, Cin, Hout * Wout).astype(compute_dtype)
        K = Cin
        w2 = weight.reshape(Cout, Cin).astype(compute_dtype)
    else:
        # TODO(synk): k>1 path still materializes im2col patches XLA-side; fully in-kernel
        # tap accumulation from the padded input would need manual (halo'd) DMA.
        patches, Hout, Wout = _im2col_t(x, kh, kw, stride, padding, dilation, compute_dtype)
        K = kh * kw * Cin
        w2 = weight.transpose(0, 2, 3, 1).reshape(Cout, K).astype(compute_dtype)

    HW = Hout * Wout
    hw_aligned = ((HW + LANE - 1) // LANE) * LANE
    THW = _pick_thw(K, Cout, hw_aligned)
    HW_pad = ((HW + THW - 1) // THW) * THW
    if HW_pad != HW:
        # Zero columns give conv output exactly 0 (bias=False), so they contribute nothing
        # to the BN sums (we divide by the true M below) and are sliced off at the end.
        patches = jnp.pad(patches, ((0, 0), (0, 0), (0, HW_pad - HW)))
    T = HW_pad // THW
    grid = (N, T)

    p_spec = pl.BlockSpec((1, K, THW), lambda n, t: (n, 0, t))
    w_spec = pl.BlockSpec((Cout, K), lambda n, t: (0, 0))
    chan_spec = pl.BlockSpec((Cout, 1), lambda n, t: (0, 0))
    y_spec = pl.BlockSpec((1, Cout, THW), lambda n, t: (n, 0, t))
    part_spec = pl.BlockSpec((1, 1, Cout, 1), lambda n, t: (n, t, 0, 0))
    parallel = pltpu.CompilerParams(
        dimension_semantics=("parallel", "parallel"),
        vmem_limit_bytes=VMEM_LIMIT)

    conv_flops = 2 * N * HW_pad * K * Cout
    conv_bytes = int(N * HW_pad * K * 2 + Cout * K * 2 + N * HW_pad * Cout * 2)

    if not bn_acti:
        out = pl.pallas_call(
            _conv_kernel, grid=grid,
            in_specs=[p_spec, w_spec], out_specs=y_spec,
            out_shape=jax.ShapeDtypeStruct((N, Cout, HW_pad), x.dtype),
            compiler_params=parallel,
            cost_estimate=pl.CostEstimate(flops=conv_flops, transcendentals=0,
                                          bytes_accessed=conv_bytes),
        )(patches, w2)
        if HW_pad != HW:
            out = out[:, :, :HW]
        return out.reshape(N, Cout, Hout, Wout)

    M = N * HW
    g2 = gamma.reshape(Cout, 1).astype(jnp.float32)
    b2 = beta.reshape(Cout, 1).astype(jnp.float32)
    a2 = alpha.reshape(Cout, 1).astype(jnp.float32)
    part_shape = jax.ShapeDtypeStruct((N, T, Cout, 1), jnp.float32)

    # Reading patches twice is cheaper than a write+read of the intermediate whenever
    # K <= 2*Cout (all the 1x1 convs) -> recompute the conv in pass 2 instead.
    recompute = K <= 2 * Cout

    if recompute:
        psum, psq = pl.pallas_call(
            _stats_only_kernel, grid=grid,
            in_specs=[p_spec, w_spec],
            out_specs=(part_spec, part_spec),
            out_shape=(part_shape, part_shape),
            compiler_params=parallel,
            cost_estimate=pl.CostEstimate(flops=conv_flops + 4 * N * HW_pad * Cout,
                                          transcendentals=0,
                                          bytes_accessed=conv_bytes),
        )(patches, w2)
        yraw = None
    else:
        yraw, psum, psq = pl.pallas_call(
            _conv_stats_kernel, grid=grid,
            in_specs=[p_spec, w_spec],
            out_specs=(y_spec, part_spec, part_spec),
            out_shape=(jax.ShapeDtypeStruct((N, Cout, HW_pad), jnp.bfloat16),
                       part_shape, part_shape),
            compiler_params=parallel,
            cost_estimate=pl.CostEstimate(flops=conv_flops + 4 * N * HW_pad * Cout,
                                          transcendentals=0,
                                          bytes_accessed=conv_bytes),
        )(patches, w2)

    # Tiny per-channel reduction of the partial stats (O(N*T*Cout)) done in XLA: keeps
    # both kernel passes fully "parallel" (both TCs on v7x) and the stats pairwise-f32.
    sum_c = jnp.sum(psum, axis=(0, 1))                     # (Cout, 1)
    sq_c = jnp.sum(psq, axis=(0, 1))
    mean = sum_c / M
    var = jnp.maximum(sq_c / M - mean * mean, 0.0)         # biased var (PyTorch BN fwd)
    scale = g2 * jax.lax.rsqrt(var + EPS)
    shift = b2 - mean * scale

    if recompute:
        out = pl.pallas_call(
            _conv_bn_prelu_kernel, grid=grid,
            in_specs=[p_spec, w_spec, chan_spec, chan_spec, chan_spec],
            out_specs=y_spec,
            out_shape=jax.ShapeDtypeStruct((N, Cout, HW_pad), x.dtype),
            compiler_params=parallel,
            cost_estimate=pl.CostEstimate(flops=conv_flops + 4 * N * HW_pad * Cout,
                                          transcendentals=0,
                                          bytes_accessed=conv_bytes
                                          + N * HW_pad * Cout * 4),
        )(patches, w2, scale, shift, a2)
    else:
        io_alias = {0: 0} if x.dtype == jnp.bfloat16 else {}
        out = pl.pallas_call(
            _bn_prelu_kernel, grid=grid,
            in_specs=[y_spec, chan_spec, chan_spec, chan_spec],
            out_specs=y_spec,
            out_shape=jax.ShapeDtypeStruct((N, Cout, HW_pad), x.dtype),
            compiler_params=parallel,
            input_output_aliases=io_alias,
            cost_estimate=pl.CostEstimate(flops=4 * N * HW_pad * Cout,
                                          transcendentals=0,
                                          bytes_accessed=int(N * HW_pad * Cout * 6)),
        )(yraw, scale, shift, a2)

    if HW_pad != HW:
        out = out[:, :, :HW]
    return out.reshape(N, Cout, Hout, Wout)


# --------------------------------------------------------------------------- reference & test
def _reference(x, weight, gamma, beta, alpha, *, stride, padding, dilation, bn_acti):
    y = jax.lax.conv_general_dilated(
        x, weight, window_strides=stride,
        padding=((padding[0], padding[0]), (padding[1], padding[1])),
        rhs_dilation=dilation,
        dimension_numbers=("NCHW", "OIHW", "NCHW"))
    if bn_acti:
        mean = y.mean(axis=(0, 2, 3), keepdims=True)
        var = jnp.square(y - mean).mean(axis=(0, 2, 3), keepdims=True)
        y = (y - mean) / jnp.sqrt(var + EPS)
        y = y * gamma.reshape(1, -1, 1, 1) + beta.reshape(1, -1, 1, 1)
        y = jnp.where(y >= 0.0, y, alpha.reshape(1, -1, 1, 1) * y)
    return y


if __name__ == "__main__":
    key = jax.random.PRNGKey(0)
    kx, kw0 = jax.random.split(key)
    N, Cin, H, W = 2, 4, 16, 16
    x = jax.random.normal(kx, (N, Cin, H, W), dtype=jnp.float32)

    configs = [
        # (Cout, k, stride, padding, dilation, bn_acti)
        (8, 3, 1, 1, (1, 1), True),    # 3x3 conv -> BN -> PReLU (im2col + bf16-yraw path)
        (8, 1, 1, 0, (1, 1), True),    # 1x1 conv -> BN -> PReLU (no-im2col + recompute path)
        (8, 3, 2, 1, (1, 1), False),   # strided conv only
    ]

    for idx, (Cout, k, stride, padding, dilation, bn_acti) in enumerate(configs):
        kk = jax.random.fold_in(kw0, idx)
        weight = jax.random.normal(kk, (Cout, Cin, k, k), dtype=jnp.float32) * 0.1
        gamma = jnp.ones((Cout,), jnp.float32)         # BatchNorm2d default init
        beta = jnp.zeros((Cout,), jnp.float32)
        alpha = jnp.full((Cout,), 0.25, jnp.float32)   # PReLU default init

        fwd = jax.jit(partial(conv_forward, stride=stride, padding=padding,
                              dilation=dilation, bn_acti=bn_acti))
        out = jax.block_until_ready(fwd(x, weight, gamma, beta, alpha))

        ref = _reference(x, weight, gamma, beta, alpha,
                         stride=_as_pair(stride), padding=_as_pair(padding),
                         dilation=_as_pair(dilation), bn_acti=bn_acti)
        assert out.shape == ref.shape, (idx, out.shape, ref.shape)
        err = float(jnp.max(jnp.abs(out - ref)))
        # bf16 MXU operands + bf16 intermediate (f32 accumulation / f32 BN epilogue)
        # -> loosened tolerance vs. the pure-f32 reference.
        assert jnp.allclose(out, ref, atol=4e-2, rtol=4e-2), (idx, err)

    print("KERNEL_OK")
</pallas_src>

<mosaic_0001>
module attributes {stable_mosaic.version = 11 : i64} {
  func.func @_conv_stats_kernel(%arg0: i32, %arg1: i32, %arg2: memref<1x36x256xbf16, #tpu.memory_space<vmem>>, %arg3: memref<8x36xbf16, #tpu.memory_space<vmem>>, %arg4: memref<1x8x256xbf16, #tpu.memory_space<vmem>>, %arg5: memref<1x1x8x1xf32, #tpu.memory_space<vmem>>, %arg6: memref<1x1x8x1xf32, #tpu.memory_space<vmem>>) attributes {dimension_semantics = [#tpu.dimension_semantics<parallel>, #tpu.dimension_semantics<parallel>], iteration_bounds = array<i64: 2, 1>, scalar_prefetch = 0 : i64, scratch_operands = 0 : i64, tpu.core_type = #tpu.core_type<tc>, window_params = [{transform_indices = @transform_0, window_bounds = array<i64: 1, 36, 256>}, {pipeline_mode = #tpu.pipeline_mode<synchronous>, transform_indices = @transform_1, window_bounds = array<i64: 8, 36>}, {transform_indices = @transform_2, window_bounds = array<i64: 1, 8, 256>}, {transform_indices = @transform_3, window_bounds = array<i64: 1, 1, 8, 1>}, {transform_indices = @transform_4, window_bounds = array<i64: 1, 1, 8, 1>}]} {
    %c0 = arith.constant 0 : index
    %c0_0 = arith.constant 0 : index
    %0 = vector.load %arg3[%c0, %c0_0] : memref<8x36xbf16, #tpu.memory_space<vmem>>, vector<8x36xbf16>
    %c0_1 = arith.constant 0 : index
    %c0_2 = arith.constant 0 : index
    %c0_3 = arith.constant 0 : index
    %1 = vector.load %arg2[%c0_1, %c0_2, %c0_3] : memref<1x36x256xbf16, #tpu.memory_space<vmem>>, vector<1x36x256xbf16>
    %2 = vector.shape_cast %1 : vector<1x36x256xbf16> to vector<36x256xbf16>
    %cst = arith.constant dense<0.000000e+00> : vector<8x256xf32>
    %3 = tpu.matmul %0, %2, %cst {dimension_numbers = #tpu.dot_dimension_numbers<[1], [0], [0], [1], [0, 0, 1, 1], [], []>} : vector<8x36xbf16>, vector<36x256xbf16>, vector<8x256xf32> -> vector<8x256xf32>
    %4 = arith.truncf %3 : vector<8x256xf32> to vector<8x256xbf16>
    %c0_4 = arith.constant 0 : index
    %c0_5 = arith.constant 0 : index
    %c0_6 = arith.constant 0 : index
    %5 = vector.load %arg4[%c0_4, %c0_5, %c0_6] : memref<1x8x256xbf16, #tpu.memory_space<vmem>>, vector<1x8x256xbf16>
    %6 = vector.shape_cast %5 : vector<1x8x256xbf16> to vector<8x256xbf16>
    %7 = vector.shape_cast %4 : vector<8x256xbf16> to vector<1x8x256xbf16>
    tpu.vector_store %arg4[%c0_4, %c0_5, %c0_6], %7 {strides = array<i32>} : memref<1x8x256xbf16, #tpu.memory_space<vmem>>, vector<1x8x256xbf16>,
    %cst_7 = arith.constant dense<0.000000e+00> : vector<8xf32>
    %8 = vector.multi_reduction <add>, %3, %cst_7 [1] : vector<8x256xf32> to vector<8xf32>
    %9 = vector.shape_cast %8 : vector<8xf32> to vector<8x1xf32>
    %c0_8 = arith.constant 0 : index
    %c0_9 = arith.constant 0 : index
    %c0_10 = arith.constant 0 : index
    %c0_11 = arith.constant 0 : index
    %10 = vector.load %arg5[%c0_8, %c0_9, %c0_10, %c0_11] : memref<1x1x8x1xf32, #tpu.memory_space<vmem>>, vector<1x1x8x1xf32>
    %11 = vector.shape_cast %10 : vector<1x1x8x1xf32> to vector<8x1xf32>
    %12 = vector.shape_cast %9 : vector<8x1xf32> to vector<1x1x8x1xf32>
    tpu.vector_store %arg5[%c0_8, %c0_9, %c0_10, %c0_11], %12 {strides = array<i32>} : memref<1x1x8x1xf32, #tpu.memory_space<vmem>>, vector<1x1x8x1xf32>,
    %13 = arith.mulf %3, %3 : vector<8x256xf32>
    %cst_12 = arith.constant dense<0.000000e+00> : vector<8xf32>
    %14 = vector.multi_reduction <add>, %13, %cst_12 [1] : vector<8x256xf32> to vector<8xf32>
    %15 = vector.shape_cast %14 : vector<8xf32> to vector<8x1xf32>
    %c0_13 = arith.constant 0 : index
    %c0_14 = arith.constant 0 : index
    %c0_15 = arith.constant 0 : index
    %c0_16 = arith.constant 0 : index
    %16 = vector.load %arg6[%c0_13, %c0_14, %c0_15, %c0_16] : memref<1x1x8x1xf32, #tpu.memory_space<vmem>>, vector<1x1x8x1xf32>
    %17 = vector.shape_cast %16 : vector<1x1x8x1xf32> to vector<8x1xf32>
    %18 = vector.shape_cast %15 : vector<8x1xf32> to vector<1x1x8x1xf32>
    tpu.vector_store %arg6[%c0_13, %c0_14, %c0_15, %c0_16], %18 {strides = array<i32>} : memref<1x1x8x1xf32, #tpu.memory_space<vmem>>, vector<1x1x8x1xf32>,
    return
  }
  func.func @transform_0(%arg0: i32, %arg1: i32) -> (i32, i32, i32) {
    %c0_i32 = arith.constant 0 : i32
    %c0_i32_0 = arith.constant 0 : i32
    return %arg0, %c0_i32, %arg1 : i32, i32, i32
  }
  func.func @transform_1(%arg0: i32, %arg1: i32) -> (i32, i32) {
    %c0_i32 = arith.constant 0 : i32
    %c0_i32_0 = arith.constant 0 : i32
    %c0_i32_1 = arith.constant 0 : i32
    return %c0_i32, %c0_i32_0 : i32, i32
  }
  func.func @transform_2(%arg0: i32, %arg1: i32) -> (i32, i32, i32) {
    %c0_i32 = arith.constant 0 : i32
    %c0_i32_0 = arith.constant 0 : i32
    return %arg0, %c0_i32, %arg1 : i32, i32, i32
  }
  func.func @transform_3(%arg0: i32, %arg1: i32) -> (i32, i32, i32, i32) {
    %c0_i32 = arith.constant 0 : i32
    %c0_i32_0 = arith.constant 0 : i32
    %c0_i32_1 = arith.constant 0 : i32
    return %arg0, %arg1, %c0_i32, %c0_i32_0 : i32, i32, i32, i32
  }
  func.func @transform_4(%arg0: i32, %arg1: i32) -> (i32, i32, i32, i32) {
    %c0_i32 = arith.constant 0 : i32
    %c0_i32_0 = arith.constant 0 : i32
    %c0_i32_1 = arith.constant 0 : i32
    return %arg0, %arg1, %c0_i32, %c0_i32_0 : i32, i32, i32, i32
  }
}

module attributes {stable_mosaic.version = 11 : i64} {
  func.func @_bn_prelu_kernel(%arg0: i32, %arg1: i32, %arg2: memref<1x8x256xbf16, #tpu.memory_space<vmem>>, %arg3: memref<8x1xf32, #tpu.memory_space<vmem>>, %arg4: memref<8x1xf32, #tpu.memory_space<vmem>>, %arg5: memref<8x1xf32, #tpu.memory_space<vmem>>, %arg6: memref<1x8x256xf32, #tpu.memory_space<vmem>>) attributes {dimension_semantics = [#tpu.dimension_semantics<parallel>, #tpu.dimension_semantics<parallel>], iteration_bounds = array<i64: 2, 1>, scalar_prefetch = 0 : i64, scratch_operands = 0 : i64, tpu.core_type = #tpu.core_type<tc>, window_params = [{transform_indices = @transform_0, window_bounds = array<i64: 1, 8, 256>}, {pipeline_mode = #tpu.pipeline_mode<synchronous>, transform_indices = @transform_1, window_bounds = array<i64: 8, 1>}, {pipeline_mode = #tpu.pipeline_mode<synchronous>, transform_indices = @transform_2, window_bounds = array<i64: 8, 1>}, {pipeline_mode = #tpu.pipeline_mode<synchronous>, transform_indices = @transform_3, window_bounds = array<i64: 8, 1>}, {transform_indices = @transform_4, window_bounds = array<i64: 1, 8, 256>}]} {
    %c0 = arith.constant 0 : index
    %c0_0 = arith.constant 0 : index
    %c0_1 = arith.constant 0 : index
    %0 = vector.load %arg2[%c0, %c0_0, %c0_1] : memref<1x8x256xbf16, #tpu.memory_space<vmem>>, vector<1x8x256xbf16>
    %1 = vector.shape_cast %0 : vector<1x8x256xbf16> to vector<8x256xbf16>
    %2 = arith.extf %1 : vector<8x256xbf16> to vector<8x256xf32>
    %c0_2 = arith.constant 0 : index
    %c0_3 = arith.constant 0 : index
    %3 = vector.load %arg3[%c0_2, %c0_3] : memref<8x1xf32, #tpu.memory_space<vmem>>, vector<8x1xf32>
    %4 = vector.broadcast %3 : vector<8x1xf32> to vector<8x256xf32>
    %5 = arith.mulf %2, %4 : vector<8x256xf32>
    %c0_4 = arith.constant 0 : index
    %c0_5 = arith.constant 0 : index
    %6 = vector.load %arg4[%c0_4, %c0_5] : memref<8x1xf32, #tpu.memory_space<vmem>>, vector<8x1xf32>
    %7 = vector.broadcast %6 : vector<8x1xf32> to vector<8x256xf32>
    %8 = arith.addf %5, %7 : vector<8x256xf32>
    %cst = arith.constant 0.000000e+00 : f32
    %9 = vector.broadcast %cst : f32 to vector<8x256xf32>
    %10 = arith.cmpf oge, %8, %9 : vector<8x256xf32>
    %c0_6 = arith.constant 0 : index
    %c0_7 = arith.constant 0 : index
    %11 = vector.load %arg5[%c0_6, %c0_7] : memref<8x1xf32, #tpu.memory_space<vmem>>, vector<8x1xf32>
    %12 = vector.broadcast %11 : vector<8x1xf32> to vector<8x256xf32>
    %13 = arith.mulf %12, %8 : vector<8x256xf32>
    %14 = arith.select %10, %8, %13 : vector<8x256xi1>, vector<8x256xf32>
    %c0_8 = arith.constant 0 : index
    %c0_9 = arith.constant 0 : index
    %c0_10 = arith.constant 0 : index
    %15 = vector.load %arg6[%c0_8, %c0_9, %c0_10] : memref<1x8x256xf32, #tpu.memory_space<vmem>>, vector<1x8x256xf32>
    %16 = vector.shape_cast %15 : vector<1x8x256xf32> to vector<8x256xf32>
    %17 = vector.shape_cast %14 : vector<8x256xf32> to vector<1x8x256xf32>
    tpu.vector_store %arg6[%c0_8, %c0_9, %c0_10], %17 {strides = array<i32>} : memref<1x8x256xf32, #tpu.memory_space<vmem>>, vector<1x8x256xf32>,
    return
  }
  func.func @transform_0(%arg0: i32, %arg1: i32) -> (i32, i32, i32) {
    %c0_i32 = arith.constant 0 : i32
    %c0_i32_0 = arith.constant 0 : i32
    return %arg0, %c0_i32, %arg1 : i32, i32, i32
  }
  func.func @transform_1(%arg0: i32, %arg1: i32) -> (i32, i32) {
    %c0_i32 = arith.constant 0 : i32
    %c0_i32_0 = arith.constant 0 : i32
    %c0_i32_1 = arith.constant 0 : i32
    return %c0_i32, %c0_i32_0 : i32, i32
  }
  func.func @transform_2(%arg0: i32, %arg1: i32) -> (i32, i32) {
    %c0_i32 = arith.constant 0 : i32
    %c0_i32_0 = arith.constant 0 : i32
    %c0_i32_1 = arith.constant 0 : i32
    return %c0_i32, %c0_i32_0 : i32, i32
  }
  func.func @transform_3(%arg0: i32, %arg1: i32) -> (i32, i32) {
    %c0_i32 = arith.constant 0 : i32
    %c0_i32_0 = arith.constant 0 : i32
    %c0_i32_1 = arith.constant 0 : i32
    return %c0_i32, %c0_i32_0 : i32, i32
  }
  func.func @transform_4(%arg0: i32, %arg1: i32) -> (i32, i32, i32) {
    %c0_i32 = arith.constant 0 : i32
    %c0_i32_0 = arith.constant 0 : i32
    return %arg0, %c0_i32, %arg1 : i32, i32, i32
  }
}

</mosaic_0001>

<llo_original>
// kernel: conv_forward.3
$region0: #{conv_forward.3}
  #allocation0 [shape = 'u32[]', space=smem, size = 0x4, offset = 0x4, fixed_abs, tag = 'smem constant byte address 0x4 - core index']
  #allocation1 [shape = 'u32[144,128]{1,0:T(1,128)}', space=vmem, size = 0x12000, scoped, tag = 'internal scratch']
  %s0 = inlined_call_operand.vmem [shape: bf16[2,8,256], index: 0, kind: input, shape index: {}]
  %s1 = inlined_call_operand.vmem [shape: f32[8,1], index: 1, kind: input, shape index: {}]
  %s2 = inlined_call_operand.vmem [shape: f32[8,1], index: 2, kind: input, shape index: {}]
  %s3 = inlined_call_operand.vmem [shape: f32[8,1], index: 3, kind: input, shape index: {}]
  %s4 = inlined_call_operand.vmem [shape: f32[2,8,256], index: 4, kind: output, shape index: {}]
  %s5 = sld [smem:[#allocation0]]
  $region49: #{conv_forward.3} parent=0
    _
  %s7 = ssub.s32 1, %s5
  %s8 = scalar_select 0, %s7, %s5
  loop: start=0, step=1, limit=4
  $region2: #{conv_forward.3} parent=0 // loop_pre_header
    _
  $region3: #{conv_forward.3} parent=0 // loop_header
    %s10 = sphi 0, %s14
    %p11 = scmp.ge.s32.totalorder %s10, 4
    %s17 = sphi 0, %s29
    %s18 = sphi 0, %s25
    %s19 = sphi 0, %s17
    %s20 = sphi 0, %s18
    %s21 = sphi 0, %s19
    %s22 = sphi 0, %s20
    %s34 = sphi 0, %s36
    %s37 = sphi 0, %s34
    %s38 = sphi 0, %s37
    %s54 = sphi 0, %s38
    %s58 = sphi 0, %s58
    %s60 = sphi 0, %s58
    %s61 = sphi 0, %s60
    %s75 = sphi 0, %s61
    %s79 = sphi 0, %s79
    %s81 = sphi 0, %s79
    %s82 = sphi 0, %s81
    %s96 = sphi 0, %s82
    %s100 = sphi 0, %s100
    %s102 = sphi 0, %s100
    %s103 = sphi 0, %s102
    %s117 = sphi 0, %s103
    %s125 = sphi 0, %s127
    %s128 = sphi 0, %s125
    %s129 = sphi 0, %s128
    %s145 = sphi 0, %s129
  $region4: #{conv_forward.3} parent=0 // loop_header_branch
    %13 = sbr.rel (%p11) target = $region8
  $region5: #{conv_forward.3} parent=0 // loop_body
    %s15 = ssub.s32 %s10, 1
    %s16 = ssub.s32 %s10, 2
    %s23 = sadd.s32 1, %s18
    %p24 = scmp.ge.s32.totalorder %s23, 1
    %s25 = scalar_select %p24, 0, %s23
    %s26 = sadd.s32 1, %s17
    %s27 = scalar_select %p24, %s26, %s17
    %p28 = scmp.ge.s32.totalorder %s27, 2
    %s29 = scalar_select %p28, 0, %s27
    %s30 = ssub.s32 %s17, %s29
    %s31 = ssub.s32 %s18, %s25
    %s32 = sor.u32 %s30, %s31
    %p33 = scmp.eq.s32.totalorder %s32, 0
    %s35 = sadd.s32 %s34, 1
    %s36 = scalar_select %p33, %s34, %s35
    %p39 = pneg %p33
    %p40 = scmp.eq.s32.totalorder %s10, 1
    %p41 = por %p39, %p40
    %p42 = scmp.ne.s32.totalorder %s34, %s37
    %p43 = scmp.eq.s32.totalorder %s10, 0
    %p44 = por %p42, %p43
    %p45 = scmp.ne.s32.totalorder %s34, %s37
    %p46 = scmp.eq.s32.totalorder %s15, 1
    %p47 = por %p45, %p46
    %p48 = scmp.ne.s32.totalorder %s37, %s38
    %p49 = scmp.eq.s32.totalorder %s15, 0
    %p50 = por %p48, %p49
    %p51 = scmp.ne.s32.totalorder %s37, %s38
    %p52 = scmp.eq.s32.totalorder %s16, 1
    %p53 = por %p51, %p52
    %p55 = scmp.ne.s32.totalorder %s38, %s54
    %p56 = scmp.eq.s32.totalorder %s16, 0
    %p57 = por %p55, %p56
    %s59 = sadd.s32 %s58, 1
    %p62 = scmp.eq.s32.totalorder %s10, 1
    %p63 = scmp.ne.s32.totalorder %s58, %s60
    %p64 = scmp.eq.s32.totalorder %s10, 0
    %p65 = por %p63, %p64
    %p66 = scmp.ne.s32.totalorder %s58, %s60
    %p67 = scmp.eq.s32.totalorder %s15, 1
    %p68 = por %p66, %p67
    %p69 = scmp.ne.s32.totalorder %s60, %s61
    %p70 = scmp.eq.s32.totalorder %s15, 0
    %p71 = por %p69, %p70
    %p72 = scmp.ne.s32.totalorder %s60, %s61
    %p73 = scmp.eq.s32.totalorder %s16, 1
    %p74 = por %p72, %p73
    %p76 = scmp.ne.s32.totalorder %s61, %s75
    %p77 = scmp.eq.s32.totalorder %s16, 0
    %p78 = por %p76, %p77
    %s80 = sadd.s32 %s79, 1
    %p83 = scmp.eq.s32.totalorder %s10, 1
    %p84 = scmp.ne.s32.totalorder %s79, %s81
    %p85 = scmp.eq.s32.totalorder %s10, 0
    %p86 = por %p84, %p85
    %p87 = scmp.ne.s32.totalorder %s79, %s81
    %p88 = scmp.eq.s32.totalorder %s15, 1
    %p89 = por %p87, %p88
    %p90 = scmp.ne.s32.totalorder %s81, %s82
    %p91 = scmp.eq.s32.totalorder %s15, 0
    %p92 = por %p90, %p91
    %p93 = scmp.ne.s32.totalorder %s81, %s82
    %p94 = scmp.eq.s32.totalorder %s16, 1
    %p95 = por %p93, %p94
    %p97 = scmp.ne.s32.totalorder %s82, %s96
    %p98 = scmp.eq.s32.totalorder %s16, 0
    %p99 = por %p97, %p98
    %s101 = sadd.s32 %s100, 1
    %p104 = scmp.eq.s32.totalorder %s10, 1
    %p105 = scmp.ne.s32.totalorder %s100, %s102
    %p106 = scmp.eq.s32.totalorder %s10, 0
    %p107 = por %p105, %p106
    %p108 = scmp.ne.s32.totalorder %s100, %s102
    %p109 = scmp.eq.s32.totalorder %s15, 1
    %p110 = por %p108, %p109
    %p111 = scmp.ne.s32.totalorder %s102, %s103
    %p112 = scmp.eq.s32.totalorder %s15, 0
    %p113 = por %p111, %p112
    %p114 = scmp.ne.s32.totalorder %s102, %s103
    %p115 = scmp.eq.s32.totalorder %s16, 1
    %p116 = por %p114, %p115
    %p118 = scmp.ne.s32.totalorder %s103, %s117
    %p119 = scmp.eq.s32.totalorder %s16, 0
    %p120 = por %p118, %p119
    %s121 = ssub.s32 %s17, %s29
    %s122 = ssub.s32 %s18, %s25
    %s123 = sor.u32 %s121, %s122
    %p124 = scmp.eq.s32.totalorder %s123, 0
    %s126 = sadd.s32 %s125, 1
    %s127 = scalar_select %p124, %s125, %s126
    %p130 = pneg %p124
    %p131 = scmp.eq.s32.totalorder %s10, 1
    %p132 = por %p130, %p131
    %p133 = scmp.ne.s32.totalorder %s125, %s128
    %p134 = scmp.eq.s32.totalorder %s10, 0
    %p135 = por %p133, %p134
    %p136 = scmp.ne.s32.totalorder %s125, %s128
    %p137 = scmp.eq.s32.totalorder %s15, 1
    %p138 = por %p136, %p137
    %p139 = scmp.ne.s32.totalorder %s128, %s129
    %p140 = scmp.eq.s32.totalorder %s15, 0
    %p141 = por %p139, %p140
    %p142 = scmp.ne.s32.totalorder %s128, %s129
    %p143 = scmp.eq.s32.totalorder %s16, 1
    %p144 = por %p142, %p143
    %p146 = scmp.ne.s32.totalorder %s129, %s145
    %p147 = scmp.eq.s32.totalorder %s16, 0
    %p148 = por %p146, %p147
    %p149 = scmp.le.s32.totalorder 1, %s10
    %p150 = scmp.lt.s32.totalorder %s10, 3
    %p151 = pnand %p149, %p150
    %p152 = pneg %p151
    // Predicated region
    $region9: #{conv_forward.3} parent=5 // pred_check
      _
    $region10: #{conv_forward.3} parent=5 // pred_check_branch
      %154 = sbr.rel (%p151) target = $region12
    $region11: #{conv_forward.3} parent=5 // pred_region
      %s155 = ssub.s32 %s10, 1
      // Predicated region
      $region13: #{conv_forward.3} parent=11 // pred_check
        %p156 = pneg %p71
      $region14: #{conv_forward.3} parent=11 // pred_check_branch
        %158 = sbr.rel (%p156) target = $region16
      $region15: #{conv_forward.3} parent=11 // pred_region
        _
      $region16: #{conv_forward.3} parent=11 // pred_fallthru
        _
      // Predicated region
      $region17: #{conv_forward.3} parent=11 // pred_check
        %p159 = pneg %p92
      $region18: #{conv_forward.3} parent=11 // pred_check_branch
        %161 = sbr.rel (%p159) target = $region20
      $region19: #{conv_forward.3} parent=11 // pred_region
        _
      $region20: #{conv_forward.3} parent=11 // pred_fallthru
        _
      // Predicated region
      $region21: #{conv_forward.3} parent=11 // pred_check
        %p162 = pneg %p113
      $region22: #{conv_forward.3} parent=11 // pred_check_branch
        %164 = sbr.rel (%p162) target = $region24
      $region23: #{conv_forward.3} parent=11 // pred_region
        _
      $region24: #{conv_forward.3} parent=11 // pred_fallthru
        _
    $region12: #{conv_forward.3} parent=5 // pred_fallthru
      _
    %p165 = scmp.lt.s32.totalorder %s10, 2
    // Predicated region
    $region25: #{conv_forward.3} parent=5 // pred_check
      %p166 = pneg %p165
    $region26: #{conv_forward.3} parent=5 // pred_check_branch
      %168 = sbr.rel (%p166) target = $region28
    $region27: #{conv_forward.3} parent=5 // pred_region
      // Predicated region
      $region29: #{conv_forward.3} parent=27 // pred_check
        %p169 = pneg %p44
      $region30: #{conv_forward.3} parent=27 // pred_check_branch
        %171 = sbr.rel (%p169) target = $region32
      $region31: #{conv_forward.3} parent=27 // pred_region
        %s172 = smul.u32 2, %s18
        %p173 = scmp.lt.s32.totalorder %s17, 1
        %s174 = scalar_select %p173, %s17, 1
        %p175 = scmp.lt.s32.totalorder %s172, 1
        %s176 = scalar_select %p175, %s172, 1
        %s177 = smul.addr %s174, 2
        %s178 = sadd.s32 %s176, %s177
        %s179 = smul.addr %s178, 4
        %s180 = scalar_lea.vmem %s0, %s179
        %s181 = smul.u32 2, %s18
      $region32: #{conv_forward.3} parent=27 // pred_fallthru
        _
    $region28: #{conv_forward.3} parent=5 // pred_fallthru
      _
    %p182 = scmp.le.s32.totalorder 1, %s10
    %p183 = scmp.lt.s32.totalorder %s10, 3
    %p184 = pnand %p182, %p183
    %p185 = pneg %p184
    // Predicated region
    $region33: #{conv_forward.3} parent=5 // pred_check
      _
    $region34: #{conv_forward.3} parent=5 // pred_check_branch
      %187 = sbr.rel (%p184) target = $region36
    $region35: #{conv_forward.3} parent=5 // pred_region
      %s188 = ssub.s32 %s10, 1
      %s189 = smul.u32 2, %s20
      %p190 = scmp.lt.s32.totalorder %s19, 1
      %s191 = scalar_select %p190, %s19, 1
      %p192 = scmp.lt.s32.totalorder %s189, 1
      %s193 = scalar_select %p192, %s189, 1
      %s194 = smul.addr %s191, 2
      %s195 = sadd.s32 %s193, %s194
      %s196 = smul.addr %s195, 4
      %s197 = scalar_lea.vmem %s0, %s196
      %p198 = pneg %p50
      %p199 = pneg %p47
      %p200 = pneg %p71
      %p201 = pneg %p68
      %p202 = pneg %p92
      %p203 = pneg %p89
      %p204 = pneg %p113
      %p205 = pneg %p110
      %p206 = pneg %p141
      %p207 = pneg %p138
      %s208 = smul.u32 2, %s20
      %p209 = scmp.lt.s32.totalorder %s19, 1
      %s210 = scalar_select %p209, %s19, 1
      %p211 = scmp.lt.s32.totalorder %s208, 1
      %s212 = scalar_select %p211, %s208, 1
      %s213 = smul.addr %s210, 2
      %s214 = sadd.s32 %s212, %s213
      %s215 = smul.addr %s214, 8
      %s216 = scalar_lea.vmem %s4, %s215
      %s217 = smul.u32 2, %s20
      %p218 = scmp.lt.s32.totalorder %s19, 1
      %s219 = scalar_select %p218, %s19, 1
      %p220 = scmp.lt.s32.totalorder %s217, 1
      %s221 = scalar_select %p220, %s217, 1
      %s222 = smul.addr %s219, 2
      %s223 = sadd.s32 %s221, %s222
      %s224 = smul.addr %s223, 4
      %s225 = scalar_lea.vmem %s0, %s224
      %s226 = smul.u32 2, %s20
      %s227 = smul.u32 2, %s20
      %p228 = scmp.lt.s32.totalorder %s19, 1
      %s229 = scalar_select %p228, %s19, 1
      %p230 = scmp.lt.s32.totalorder %s227, 1
      %s231 = scalar_select %p230, %s227, 1
      %s232 = smul.addr %s229, 2
      %s233 = sadd.s32 %s231, %s232
      %s234 = smul.addr %s233, 8
      %s235 = scalar_lea.vmem %s4, %s234
      %s236 = smul.u32 2, %s20
      %v237 = vld [vmem:[%s225] sm:$0xff]
      %v238 = vunpack.c.l.bf16 %v237
      %v239 = vunpack.c.h.bf16 %v237
      %v240 = vld [vmem:[%s1] sm:$0xff]
      %242 = vset.pattern.permute.xlu0 0
      %243 = vperm.xlu0 %242, %v240
      %v244 = vpop.permute.xlu0 %243
      %v246 = vmul.f32 %v238, %v244
      %v247 = vmul.f32 %v239, %v244
      %v248 = vld [vmem:[%s2] sm:$0xff]
      %250 = vset.pattern.permute.xlu0 0
      %251 = vperm.xlu0 %250, %v248
      %v252 = vpop.permute.xlu0 %251
      %v254 = vadd.f32 %v246, %v252
      %v255 = vadd.f32 %v247, %v252
      %vm256 = vcmp.ge.f32.partialorder %v254, 0.0
      %vm257 = vcmp.ge.f32.partialorder %v255, 0.0
      %v258 = vld [vmem:[%s3] sm:$0xff]
      %260 = vset.pattern.permute.xlu0 0
      %261 = vperm.xlu0 %260, %v258
      %v262 = vpop.permute.xlu0 %261
      %v264 = vmul.f32 %v262, %v254
      %v265 = vmul.f32 %v262, %v255
      %v266 = vsel %vm256, %v254, %v264
      %v267 = vsel %vm257, %v255, %v265
      %268 = vst [vmem:[%s235] sm:$0xff] %v266
      %269 = vst [vmem:[%s235 + $0x8] sm:$0xff] %v267
      %s270 = smul.u32 2, %s20
      %p271 = scmp.lt.s32.totalorder %s19, 1
      %s272 = scalar_select %p271, %s19, 1
      %p273 = scmp.lt.s32.totalorder %s270, 1
      %s274 = scalar_select %p273, %s270, 1
      %s275 = smul.addr %s272, 2
      %s276 = sadd.s32 %s274, %s275
      %s277 = smul.addr %s276, 8
      %s278 = scalar_lea.vmem %s4, %s277
      // Predicated region
      $region37: #{conv_forward.3} parent=35 // pred_check
        %p279 = pneg %p138
      $region38: #{conv_forward.3} parent=35 // pred_check_branch
        %281 = sbr.rel (%p279) target = $region40
      $region39: #{conv_forward.3} parent=35 // pred_region
        %s282 = smul.u32 2, %s20
      $region40: #{conv_forward.3} parent=35 // pred_fallthru
        _
    $region36: #{conv_forward.3} parent=5 // pred_fallthru
      _
    %p283 = scmp.le.s32.totalorder 2, %s10
    // Predicated region
    $region41: #{conv_forward.3} parent=5 // pred_check
      %p284 = pneg %p283
    $region42: #{conv_forward.3} parent=5 // pred_check_branch
      %286 = sbr.rel (%p284) target = $region44
    $region43: #{conv_forward.3} parent=5 // pred_region
      %s287 = ssub.s32 %s10, 2
      // Predicated region
      $region45: #{conv_forward.3} parent=43 // pred_check
        %p288 = pneg %p144
      $region46: #{conv_forward.3} parent=43 // pred_check_branch
        %290 = sbr.rel (%p288) target = $region48
      $region47: #{conv_forward.3} parent=43 // pred_region
        %s291 = smul.u32 2, %s22
        %p292 = scmp.lt.s32.totalorder %s21, 1
        %s293 = scalar_select %p292, %s21, 1
        %p294 = scmp.lt.s32.totalorder %s291, 1
        %s295 = scalar_select %p294, %s291, 1
        %s296 = smul.addr %s293, 2
        %s297 = sadd.s32 %s295, %s296
        %s298 = smul.addr %s297, 8
        %s299 = scalar_lea.vmem %s4, %s298
      $region48: #{conv_forward.3} parent=43 // pred_fallthru
        _
    $region44: #{conv_forward.3} parent=5 // pred_fallthru
      _
  $region6: #{conv_forward.3} parent=0 // loop_footer
    %s14 = sadd.s32 1, %s10
  $region7: #{conv_forward.3} parent=0 // loop_footer_branch
    %9 = sbr.rel target = $region3
  $region8: #{conv_forward.3} parent=0 // loop_exit
    _

// kernel: conv_forward.2
$region0: #{conv_forward.2}
  #allocation0 [shape = 'u32[]', space=smem, size = 0x4, offset = 0x4, fixed_abs, tag = 'smem constant byte address 0x4 - core index']
  #allocation1 [shape = 'u32[144,128]{1,0:T(1,128)}', space=vmem, size = 0x12000, scoped, tag = 'internal scratch']
  %s0 = inlined_call_operand.vmem [shape: bf16[2,36,256], index: 0, kind: input, shape index: {}]
  %s1 = inlined_call_operand.vmem [shape: bf16[8,36], index: 1, kind: input, shape index: {}]
  %s2 = inlined_call_operand.vmem [shape: bf16[2,8,256], index: 2, kind: output, shape index: {0}]
  %s3 = inlined_call_operand.vmem [shape: f32[2,1,8,1], index: 3, kind: output, shape index: {1}]
  %s4 = inlined_call_operand.vmem [shape: f32[2,1,8,1], index: 4, kind: output, shape index: {2}]
  %5 = xla_tuple %s2, %s3, %s4
  %s6 = sld [smem:[#allocation0]]
  $region57: #{conv_forward.2} parent=0
    _
  %s8 = ssub.s32 1, %s6
  %s9 = scalar_select 0, %s8, %s6
  loop: start=0, step=1, limit=4
  $region2: #{conv_forward.2} parent=0 // loop_pre_header
    _
  $region3: #{conv_forward.2} parent=0 // loop_header
    %s11 = sphi 0, %s15
    %p12 = scmp.ge.s32.totalorder %s11, 4
    %s18 = sphi 0, %s30
    %s19 = sphi 0, %s26
    %s20 = sphi 0, %s18
    %s21 = sphi 0, %s19
    %s22 = sphi 0, %s20
    %s23 = sphi 0, %s21
    %s35 = sphi 0, %s37
    %s38 = sphi 0, %s35
    %s39 = sphi 0, %s38
    %s55 = sphi 0, %s39
    %s59 = sphi 0, %s59
    %s61 = sphi 0, %s59
    %s62 = sphi 0, %s61
    %s76 = sphi 0, %s62
    %s84 = sphi 0, %s86
    %s87 = sphi 0, %s84
    %s88 = sphi 0, %s87
    %s104 = sphi 0, %s88
    %s112 = sphi 0, %s114
    %s115 = sphi 0, %s112
    %s116 = sphi 0, %s115
    %s132 = sphi 0, %s116
    %s140 = sphi 0, %s142
    %s143 = sphi 0, %s140
    %s144 = sphi 0, %s143
    %s160 = sphi 0, %s144
  $region4: #{conv_forward.2} parent=0 // loop_header_branch
    %14 = sbr.rel (%p12) target = $region8
  $region5: #{conv_forward.2} parent=0 // loop_body
    %s16 = ssub.s32 %s11, 1
    %s17 = ssub.s32 %s11, 2
    %s24 = sadd.s32 1, %s19
    %p25 = scmp.ge.s32.totalorder %s24, 1
    %s26 = scalar_select %p25, 0, %s24
    %s27 = sadd.s32 1, %s18
    %s28 = scalar_select %p25, %s27, %s18
    %p29 = scmp.ge.s32.totalorder %s28, 2
    %s30 = scalar_select %p29, 0, %s28
    %s31 = ssub.s32 %s18, %s30
    %s32 = ssub.s32 %s19, %s26
    %s33 = sor.u32 %s31, %s32
    %p34 = scmp.eq.s32.totalorder %s33, 0
    %s36 = sadd.s32 %s35, 1
    %s37 = scalar_select %p34, %s35, %s36
    %p40 = pneg %p34
    %p41 = scmp.eq.s32.totalorder %s11, 1
    %p42 = por %p40, %p41
    %p43 = scmp.ne.s32.totalorder %s35, %s38
    %p44 = scmp.eq.s32.totalorder %s11, 0
    %p45 = por %p43, %p44
    %p46 = scmp.ne.s32.totalorder %s35, %s38
    %p47 = scmp.eq.s32.totalorder %s16, 1
    %p48 = por %p46, %p47
    %p49 = scmp.ne.s32.totalorder %s38, %s39
    %p50 = scmp.eq.s32.totalorder %s16, 0
    %p51 = por %p49, %p50
    %p52 = scmp.ne.s32.totalorder %s38, %s39
    %p53 = scmp.eq.s32.totalorder %s17, 1
    %p54 = por %p52, %p53
    %p56 = scmp.ne.s32.totalorder %s39, %s55
    %p57 = scmp.eq.s32.totalorder %s17, 0
    %p58 = por %p56, %p57
    %s60 = sadd.s32 %s59, 1
    %p63 = scmp.eq.s32.totalorder %s11, 1
    %p64 = scmp.ne.s32.totalorder %s59, %s61
    %p65 = scmp.eq.s32.totalorder %s11, 0
    %p66 = por %p64, %p65
    %p67 = scmp.ne.s32.totalorder %s59, %s61
    %p68 = scmp.eq.s32.totalorder %s16, 1
    %p69 = por %p67, %p68
    %p70 = scmp.ne.s32.totalorder %s61, %s62
    %p71 = scmp.eq.s32.totalorder %s16, 0
    %p72 = por %p70, %p71
    %p73 = scmp.ne.s32.totalorder %s61, %s62
    %p74 = scmp.eq.s32.totalorder %s17, 1
    %p75 = por %p73, %p74
    %p77 = scmp.ne.s32.totalorder %s62, %s76
    %p78 = scmp.eq.s32.totalorder %s17, 0
    %p79 = por %p77, %p78
    %s80 = ssub.s32 %s18, %s30
    %s81 = ssub.s32 %s19, %s26
    %s82 = sor.u32 %s80, %s81
    %p83 = scmp.eq.s32.totalorder %s82, 0
    %s85 = sadd.s32 %s84, 1
    %s86 = scalar_select %p83, %s84, %s85
    %p89 = pneg %p83
    %p90 = scmp.eq.s32.totalorder %s11, 1
    %p91 = por %p89, %p90
    %p92 = scmp.ne.s32.totalorder %s84, %s87
    %p93 = scmp.eq.s32.totalorder %s11, 0
    %p94 = por %p92, %p93
    %p95 = scmp.ne.s32.totalorder %s84, %s87
    %p96 = scmp.eq.s32.totalorder %s16, 1
    %p97 = por %p95, %p96
    %p98 = scmp.ne.s32.totalorder %s87, %s88
    %p99 = scmp.eq.s32.totalorder %s16, 0
    %p100 = por %p98, %p99
    %p101 = scmp.ne.s32.totalorder %s87, %s88
    %p102 = scmp.eq.s32.totalorder %s17, 1
    %p103 = por %p101, %p102
    %p105 = scmp.ne.s32.totalorder %s88, %s104
    %p106 = scmp.eq.s32.totalorder %s17, 0
    %p107 = por %p105, %p106
    %s108 = ssub.s32 %s18, %s30
    %s109 = ssub.s32 %s19, %s26
    %s110 = sor.u32 %s108, %s109
    %p111 = scmp.eq.s32.totalorder %s110, 0
    %s113 = sadd.s32 %s112, 1
    %s114 = scalar_select %p111, %s112, %s113
    %p117 = pneg %p111
    %p118 = scmp.eq.s32.totalorder %s11, 1
    %p119 = por %p117, %p118
    %p120 = scmp.ne.s32.totalorder %s112, %s115
    %p121 = scmp.eq.s32.totalorder %s11, 0
    %p122 = por %p120, %p121
    %p123 = scmp.ne.s32.totalorder %s112, %s115
    %p124 = scmp.eq.s32.totalorder %s16, 1
    %p125 = por %p123, %p124
    %p126 = scmp.ne.s32.totalorder %s115, %s116
    %p127 = scmp.eq.s32.totalorder %s16, 0
    %p128 = por %p126, %p127
    %p129 = scmp.ne.s32.totalorder %s115, %s116
    %p130 = scmp.eq.s32.totalorder %s17, 1
    %p131 = por %p129, %p130
    %p133 = scmp.ne.s32.totalorder %s116, %s132
    %p134 = scmp.eq.s32.totalorder %s17, 0
    %p135 = por %p133, %p134
    %s136 = ssub.s32 %s18, %s30
    %s137 = ssub.s32 %s19, %s26
    %s138 = sor.u32 %s136, %s137
    %p139 = scmp.eq.s32.totalorder %s138, 0
    %s141 = sadd.s32 %s140, 1
    %s142 = scalar_select %p139, %s140, %s141
    %p145 = pneg %p139
    %p146 = scmp.eq.s32.totalorder %s11, 1
    %p147 = por %p145, %p146
    %p148 = scmp.ne.s32.totalorder %s140, %s143
    %p149 = scmp.eq.s32.totalorder %s11, 0
    %p150 = por %p148, %p149
    %p151 = scmp.ne.s32.totalorder %s140, %s143
    %p152 = scmp.eq.s32.totalorder %s16, 1
    %p153 = por %p151, %p152
    %p154 = scmp.ne.s32.totalorder %s143, %s144
    %p155 = scmp.eq.s32.totalorder %s16, 0
    %p156 = por %p154, %p155
    %p157 = scmp.ne.s32.totalorder %s143, %s144
    %p158 = scmp.eq.s32.totalorder %s17, 1
    %p159 = por %p157, %p158
    %p161 = scmp.ne.s32.totalorder %s144, %s160
    %p162 = scmp.eq.s32.totalorder %s17, 0
    %p163 = por %p161, %p162
    %p164 = scmp.le.s32.totalorder 1, %s11
    %p165 = scmp.lt.s32.totalorder %s11, 3
    %p166 = pnand %p164, %p165
    %p167 = pneg %p166
    // Predicated region
    $region9: #{conv_forward.2} parent=5 // pred_check
      _
    $region10: #{conv_forward.2} parent=5 // pred_check_branch
      %169 = sbr.rel (%p166) target = $region12
    $region11: #{conv_forward.2} parent=5 // pred_region
      %s170 = ssub.s32 %s11, 1
      // Predicated region
      $region13: #{conv_forward.2} parent=11 // pred_check
        %p171 = pneg %p72
      $region14: #{conv_forward.2} parent=11 // pred_check_branch
        %173 = sbr.rel (%p171) target = $region16
      $region15: #{conv_forward.2} parent=11 // pred_region
        _
      $region16: #{conv_forward.2} parent=11 // pred_fallthru
        _
    $region12: #{conv_forward.2} parent=5 // pred_fallthru
      _
    %p174 = scmp.lt.s32.totalorder %s11, 2
    // Predicated region
    $region17: #{conv_forward.2} parent=5 // pred_check
      %p175 = pneg %p174
    $region18: #{conv_forward.2} parent=5 // pred_check_branch
      %177 = sbr.rel (%p175) target = $region20
    $region19: #{conv_forward.2} parent=5 // pred_region
      // Predicated region
      $region21: #{conv_forward.2} parent=19 // pred_check
        %p178 = pneg %p45
      $region22: #{conv_forward.2} parent=19 // pred_check_branch
        %180 = sbr.rel (%p178) target = $region24
      $region23: #{conv_forward.2} parent=19 // pred_region
        %s181 = smul.u32 2, %s19
        %p182 = scmp.lt.s32.totalorder %s18, 1
        %s183 = scalar_select %p182, %s18, 1
        %p184 = scmp.lt.s32.totalorder %s181, 1
        %s185 = scalar_select %p184, %s181, 1
        %s186 = smul.addr %s183, 10
        %s187 = sadd.s32 %s185, %s186
        %s188 = smul.addr %s187, 4
        %s189 = scalar_lea.vmem %s0, %s188
        %s190 = smul.u32 2, %s19
      $region24: #{conv_forward.2} parent=19 // pred_fallthru
        _
    $region20: #{conv_forward.2} parent=5 // pred_fallthru
      _
    %p191 = scmp.le.s32.totalorder 1, %s11
    %p192 = scmp.lt.s32.totalorder %s11, 3
    %p193 = pnand %p191, %p192
    %p194 = pneg %p193
    // Predicated region
    $region25: #{conv_forward.2} parent=5 // pred_check
      _
    $region26: #{conv_forward.2} parent=5 // pred_check_branch
      %196 = sbr.rel (%p193) target = $region28
    $region27: #{conv_forward.2} parent=5 // pred_region
      %s197 = ssub.s32 %s11, 1
      %s198 = smul.u32 2, %s21
      %p199 = scmp.lt.s32.totalorder %s20, 1
      %s200 = scalar_select %p199, %s20, 1
      %p201 = scmp.lt.s32.totalorder %s198, 1
      %s202 = scalar_select %p201, %s198, 1
      %s203 = smul.addr %s200, 10
      %s204 = sadd.s32 %s202, %s203
      %s205 = smul.addr %s204, 4
      %s206 = scalar_lea.vmem %s0, %s205
      %p207 = pneg %p51
      %p208 = pneg %p48
      %p209 = pneg %p72
      %p210 = pneg %p69
      %p211 = pneg %p100
      %p212 = pneg %p97
      %s213 = smul.u32 2, %s21
      %p214 = scmp.lt.s32.totalorder %s20, 1
      %s215 = scalar_select %p214, %s20, 1
      %p216 = scmp.lt.s32.totalorder %s213, 1
      %s217 = scalar_select %p216, %s213, 1
      %s218 = smul.addr %s215, 2
      %s219 = sadd.s32 %s217, %s218
      %s220 = smul.addr %s219, 4
      %s221 = scalar_lea.vmem %s2, %s220
      %p222 = pneg %p128
      %p223 = pneg %p125
      %p224 = scmp.lt.s32.totalorder %s20, 1
      %s225 = scalar_select %p224, %s20, 1
      %p226 = scmp.lt.s32.totalorder %s21, 0
      %s227 = scalar_select %p226, %s21, 0
      %s228 = sadd.s32 %s227, %s225
      %s229 = smul.addr %s228, 8
      %s230 = scalar_lea.vmem %s3, %s229
      %p231 = pneg %p156
      %p232 = pneg %p153
      %p233 = scmp.lt.s32.totalorder %s20, 1
      %s234 = scalar_select %p233, %s20, 1
      %p235 = scmp.lt.s32.totalorder %s21, 0
      %s236 = scalar_select %p235, %s21, 0
      %s237 = sadd.s32 %s236, %s234
      %s238 = smul.addr %s237, 8
      %s239 = scalar_lea.vmem %s4, %s238
      %s240 = smul.u32 2, %s21
      %p241 = scmp.lt.s32.totalorder %s20, 1
      %s242 = scalar_select %p241, %s20, 1
      %p243 = scmp.lt.s32.totalorder %s240, 1
      %s244 = scalar_select %p243, %s240, 1
      %s245 = smul.addr %s242, 10
      %s246 = sadd.s32 %s244, %s245
      %s247 = smul.addr %s246, 4
      %s248 = scalar_lea.vmem %s0, %s247
      %s249 = smul.u32 2, %s21
      %s250 = smul.u32 2, %s21
      %p251 = scmp.lt.s32.totalorder %s20, 1
      %s252 = scalar_select %p251, %s20, 1
      %p253 = scmp.lt.s32.totalorder %s250, 1
      %s254 = scalar_select %p253, %s250, 1
      %s255 = smul.addr %s252, 2
      %s256 = sadd.s32 %s254, %s255
      %s257 = smul.addr %s256, 4
      %s258 = scalar_lea.vmem %s2, %s257
      %s259 = smul.u32 2, %s21
      %p260 = scmp.lt.s32.totalorder %s20, 1
      %s261 = scalar_select %p260, %s20, 1
      %p262 = scmp.lt.s32.totalorder %s21, 0
      %s263 = scalar_select %p262, %s21, 0
      %s264 = sadd.s32 %s263, %s261
      %s265 = smul.addr %s264, 8
      %s266 = scalar_lea.vmem %s3, %s265
      %p267 = scmp.lt.s32.totalorder %s20, 1
      %s268 = scalar_select %p267, %s20, 1
      %p269 = scmp.lt.s32.totalorder %s21, 0
      %s270 = scalar_select %p269, %s21, 0
      %s271 = sadd.s32 %s270, %s268
      %s272 = smul.addr %s271, 8
      %s273 = scalar_lea.vmem %s4, %s272
      %v275 = vld [vmem:[%s1] sm:$0xf]
      %v276 = vld [vmem:[%s248] sm:$0xff]
      %v277 = vld [vmem:[%s248 + $0x8] sm:$0xff]
      %v278 = vld [vmem:[%s248 + $0x10] sm:$0xff]
      %v279 = vld [vmem:[%s248 + $0x18] sm:$0xff]
      %v280 = vld [vmem:[%s248 + $0x20] sm:$0x33]
      %v286 = vunpack.c.l.b16 %v276
      %v287 = vunpack.c.h.b16 %v276
      %v288 = vunpack.c.l.b16 %v277
      %v289 = vunpack.c.h.b16 %v277
      %v290 = vunpack.c.l.b16 %v278
      %v291 = vunpack.c.h.b16 %v278
      %v292 = vunpack.c.l.b16 %v279
      %v293 = vunpack.c.h.b16 %v279
      %v294 = vunpack.c.l.b16 %v280
      %v295 = vunpack.c.h.b16 %v280
      %v296 = vpack.c.b16 %v288, %v286
      %v297 = vpack.c.b16 %v289, %v287
      %v298 = vpack.c.b16 %v292, %v290
      %v299 = vpack.c.b16 %v293, %v291
      %v300 = vpack.c.b16 %v294, %v294
      %v301 = vpack.c.b16 %v295, %v295
      %vm306 = vcmask 293888
      %v308 = vsel %vm306, %v275, 0
      %vm310 = vcmask 1041408
      %v312 = vsel %vm310, %v300, 0
      %v315 = vsel %vm310, %v301, 0
      %317 = vmatprep.subr.bf16.mxu0 0
      %318 = vmatpush1.bf16.msra.mxu0 0
      %319 = vmatprep.subr.bf16.mxu0 0
      %320 = vmatpush1.bf16.msra.mxu0 0
      %321 = vmatprep.subr.bf16.mxu0 0
      %322 = vmatpush1.bf16.msra.mxu0 0
      %323 = vmatprep.subr.bf16.mxu0 0
      %324 = vmatpush1.bf16.msra.mxu0 0
      %325 = vmatprep.subr.bf16.mxu0 0
      %326 = vmatpush1.bf16.msra.mxu0 0
      %327 = vmatprep.subr.bf16.mxu0 %v315
      %328 = vmatpush1.bf16.msra.mxu0 %v312
      %329 = vmatprep.subr.bf16.mxu0 %v299
      %330 = vmatpush1.bf16.msra.mxu0 %v298
      %331 = vmatprep.subr.bf16.mxu0 %v297
      %332 = vmatpush1.bf16.msra.mxu0 %v296
      %333 = vmatprep.subr.bf16.mxu0 0
      %334 = vmatpush2.bf16.msra.mxu0 0
      %335 = vmatprep.subr.bf16.mxu0 0
      %336 = vmatpush2.bf16.msra.mxu0 0
      %337 = vmatprep.subr.bf16.mxu0 0
      %338 = vmatpush2.bf16.msra.mxu0 0
      %339 = vmatprep.subr.bf16.mxu0 0
      %340 = vmatpush2.bf16.msra.mxu0 0
      %341 = vmatprep.subr.bf16.mxu0 0
      %342 = vmatpush2.bf16.msra.mxu0 0
      %343 = vmatprep.subr.bf16.mxu0 0
      %344 = vmatpush2.bf16.msra.mxu0 0
      %345 = vmatprep.subr.bf16.mxu0 0
      %346 = vmatpush2.bf16.msra.mxu0 0
      %347 = vmatprep.subr.bf16.mxu0 0
      %348 = vmatpush2.bf16.msra.mxu0 0
      %349 = vmatprep.mubr.bf16.mxu0 0
      %350 = vmatmul.mubr.bf16.gmra.mxu0 %v308
      %v351 = vpop.f32.mrf.mxu0
      %v352 = vadd.f32 0.0, %v351
      %v353 = vpop.f32.mrf.mxu0
      %v354 = vadd.f32 0.0, %v353
      %v355 = vpop.f32.mrf.mxu0
      %v356 = vpop.f32.mrf.mxu0
      %357 = vdwg.mxu0
      %v358 = vpack.c.bf16 %v352, %v352
      %v359 = vpack.c.bf16 %v354, %v354
      %v362 = vunpack.c.l.b16 %v358
      %v363 = vunpack.c.l.b16 %v359
      %v364 = vpack.c.b16 %v363, %v362
      %366 = vst [vmem:[%s258] sm:$0xff] %v364
      %v367 = vadd.f32 %v352, %v354
      %368 = vadd.xlane.f32.xlu0 %v367
      %v369 = vpop.xlane.xlu0 %368
      %vm370 = vcmask 7168
      %371 = vst.msk [vmem:[%s266] sm:$0xff] %vm370, %v369
      %v372 = vmul.f32 %v352, %v352
      %v373 = vmul.f32 %v354, %v354
      %v374 = vadd.f32 %v372, %v373
      %375 = vadd.xlane.f32.xlu0 %v374
      %v376 = vpop.xlane.xlu0 %375
      %377 = vst.msk [vmem:[%s273] sm:$0xff] %vm370, %v376
      %s378 = smul.u32 2, %s21
      %p379 = scmp.lt.s32.totalorder %s20, 1
      %s380 = scalar_select %p379, %s20, 1
      %p381 = scmp.lt.s32.totalorder %s378, 1
      %s382 = scalar_select %p381, %s378, 1
      %s383 = smul.addr %s380, 2
      %s384 = sadd.s32 %s382, %s383
      %s385 = smul.addr %s384, 4
      %s386 = scalar_lea.vmem %s2, %s385
      %p387 = scmp.lt.s32.totalorder %s20, 1
      %s388 = scalar_select %p387, %s20, 1
      %p389 = scmp.lt.s32.totalorder %s21, 0
      %s390 = scalar_select %p389, %s21, 0
      %s391 = sadd.s32 %s390, %s388
      %s392 = smul.addr %s391, 8
      %s393 = scalar_lea.vmem %s3, %s392
      %p394 = scmp.lt.s32.totalorder %s20, 1
      %s395 = scalar_select %p394, %s20, 1
      %p396 = scmp.lt.s32.totalorder %s21, 0
      %s397 = scalar_select %p396, %s21, 0
      %s398 = sadd.s32 %s397, %s395
      %s399 = smul.addr %s398, 8
      %s400 = scalar_lea.vmem %s4, %s399
      // Predicated region
      $region29: #{conv_forward.2} parent=27 // pred_check
        %p401 = pneg %p97
      $region30: #{conv_forward.2} parent=27 // pred_check_branch
        %403 = sbr.rel (%p401) target = $region32
      $region31: #{conv_forward.2} parent=27 // pred_region
        %s404 = smul.u32 2, %s21
      $region32: #{conv_forward.2} parent=27 // pred_fallthru
        _
      // Predicated region
      $region33: #{conv_forward.2} parent=27 // pred_check
        %p405 = pneg %p125
      $region34: #{conv_forward.2} parent=27 // pred_check_branch
        %407 = sbr.rel (%p405) target = $region36
      $region35: #{conv_forward.2} parent=27 // pred_region
        _
      $region36: #{conv_forward.2} parent=27 // pred_fallthru
        _
      // Predicated region
      $region37: #{conv_forward.2} parent=27 // pred_check
        %p408 = pneg %p153
      $region38: #{conv_forward.2} parent=27 // pred_check_branch
        %410 = sbr.rel (%p408) target = $region40
      $region39: #{conv_forward.2} parent=27 // pred_region
        _
      $region40: #{conv_forward.2} parent=27 // pred_fallthru
        _
    $region28: #{conv_forward.2} parent=5 // pred_fallthru
      _
    %p411 = scmp.le.s32.totalorder 2, %s11
    // Predicated region
    $region41: #{conv_forward.2} parent=5 // pred_check
      %p412 = pneg %p411
    $region42: #{conv_forward.2} parent=5 // pred_check_branch
      %414 = sbr.rel (%p412) target = $region44
    $region43: #{conv_forward.2} parent=5 // pred_region
      %s415 = ssub.s32 %s11, 2
      // Predicated region
      $region45: #{conv_forward.2} parent=43 // pred_check
        %p416 = pneg %p103
      $region46: #{conv_forward.2} parent=43 // pred_check_branch
        %418 = sbr.rel (%p416) target = $region48
      $region47: #{conv_forward.2} parent=43 // pred_region
        %s419 = smul.u32 2, %s23
        %p420 = scmp.lt.s32.totalorder %s22, 1
        %s421 = scalar_select %p420, %s22, 1
        %p422 = scmp.lt.s32.totalorder %s419, 1
        %s423 = scalar_select %p422, %s419, 1
        %s424 = smul.addr %s421, 2
        %s425 = sadd.s32 %s423, %s424
        %s426 = smul.addr %s425, 4
        %s427 = scalar_lea.vmem %s2, %s426
      $region48: #{conv_forward.2} parent=43 // pred_fallthru
        _
      // Predicated region
      $region49: #{conv_forward.2} parent=43 // pred_check
        %p428 = pneg %p131
      $region50: #{conv_forward.2} parent=43 // pred_check_branch
        %430 = sbr.rel (%p428) target = $region52
      $region51: #{conv_forward.2} parent=43 // pred_region
        %p431 = scmp.lt.s32.totalorder %s22, 1
        %s432 = scalar_select %p431, %s22, 1
        %p433 = scmp.lt.s32.totalorder %s23, 0
        %s434 = scalar_select %p433, %s23, 0
        %s435 = sadd.s32 %s434, %s432
        %s436 = smul.addr %s435, 8
        %s437 = scalar_lea.vmem %s3, %s436
      $region52: #{conv_forward.2} parent=43 // pred_fallthru
        _
      // Predicated region
      $region53: #{conv_forward.2} parent=43 // pred_check
        %p438 = pneg %p159
      $region54: #{conv_forward.2} parent=43 // pred_check_branch
        %440 = sbr.rel (%p438) target = $region56
      $region55: #{conv_forward.2} parent=43 // pred_region
        %p441 = scmp.lt.s32.totalorder %s22, 1
        %s442 = scalar_select %p441, %s22, 1
        %p443 = scmp.lt.s32.totalorder %s23, 0
        %s444 = scalar_select %p443, %s23, 0
        %s445 = sadd.s32 %s444, %s442
        %s446 = smul.addr %s445, 8
        %s447 = scalar_lea.vmem %s4, %s446
      $region56: #{conv_forward.2} parent=43 // pred_fallthru
        _
    $region44: #{conv_forward.2} parent=5 // pred_fallthru
      _
  $region6: #{conv_forward.2} parent=0 // loop_footer
    %s15 = sadd.s32 1, %s11
  $region7: #{conv_forward.2} parent=0 // loop_footer_branch
    %10 = sbr.rel target = $region3
  $region8: #{conv_forward.2} parent=0 // loop_exit
    _

</llo_original>
